<compile_context>
chip_gen: v5e
topology: v5e:2x2
jax: 0.10.0
libtpu: 0.0.40
codegen_flags: <defaults>
</compile_context>

<pallas_src>
import jax
import jax.numpy as jnp
from jax.experimental import pallas as pl
from jax.experimental.pallas import tpu as pltpu

LN_EPS = 1e-5


def _ffn_kernel(x_ref, w1_ref, b1_ref, w2_ref, b2_ref, g_ref, beta_ref, a_ref, o_ref):
    x = x_ref[...]                                                       # (tm, P*D), native dtype

    # 1x1 conv #1 (D -> Dh) + ReLU, on the lane-packed layout (block-diag weights).
    h = jnp.dot(x, w1_ref[...], preferred_element_type=jnp.float32) + b1_ref[...]
    h = jnp.maximum(h, 0.0)                                              # (tm, P*Dh)

    # 1x1 conv #2 (Dh -> D).
    y = jnp.dot(h, w2_ref[...], preferred_element_type=jnp.float32) + b2_ref[...]

    # TODO(synk): nn.Dropout is a training-only op; identity here (inference forward).
    z = y + x.astype(jnp.float32)                                        # residual add, f32

    # Per-token LayerNorm stats via a block-diagonal averaging matmul (stays lane-dense,
    # no reshape).  Split operands into bf16-exact hi + lo parts so the MXU's bf16
    # truncation does not bias the statistics (~f32-accurate mean / E[z^2]).
    a = a_ref[...]                                                       # (P*D, P*D), 1/D blocks
    z_hi = z.astype(jnp.bfloat16).astype(jnp.float32)
    z_lo = z - z_hi
    m = (jnp.dot(z_hi, a, preferred_element_type=jnp.float32)
         + jnp.dot(z_lo, a, preferred_element_type=jnp.float32))         # per-token mean, bcast
    zz = z * z
    zz_hi = zz.astype(jnp.bfloat16).astype(jnp.float32)
    zz_lo = zz - zz_hi
    ez2 = (jnp.dot(zz_hi, a, preferred_element_type=jnp.float32)
           + jnp.dot(zz_lo, a, preferred_element_type=jnp.float32))      # per-token E[z^2]

    var = ez2 - m * m
    zn = (z - m) * jax.lax.rsqrt(var + LN_EPS)
    o_ref[...] = (zn * g_ref[...] + beta_ref[...]).astype(o_ref.dtype)


def positionwise_ffn_forward(x, params, *, block_tokens=4096):
    """Pallas forward of PositionwiseFeedForwardUseConv.

    x: (B, T, d_in).  params holds torch-layout weights:
      w1 (d_hid, d_in, 1), b1 (d_hid,), w2 (d_in, d_hid, 1), b2 (d_in,),
      ln_g (d_in,), ln_b (d_in,).
    """
    B, T, D = x.shape
    Dh = params["w1"].shape[0]
    M = B * T
    dtype = x.dtype

    # Lane packing: P consecutive tokens side by side -> last axis is 128-lane dense.
    # Fall back to P=1 if D does not divide 128 or M is not a multiple of P.
    P = 128 // D if (D <= 128 and 128 % D == 0 and M % max(1, 128 // D) == 0) else 1
    Dp = P * D
    Dhp = P * Dh
    Mp = M // P

    x2 = x.reshape(Mp, Dp)                       # free row-major repack (same bytes)

    # torch Conv1d(k=1) weights -> (in, out) matmul layout; block-diagonal copies so each
    # packed token slot sees its own weights.  MXU operands stay in the model dtype.
    w1 = params["w1"][:, :, 0].T.astype(jnp.float32)                    # (D, Dh)
    w2 = params["w2"][:, :, 0].T.astype(jnp.float32)                    # (Dh, D)
    eye_p = jnp.eye(P, dtype=jnp.float32)
    w1p = jnp.kron(eye_p, w1).astype(dtype)                             # (Dp, Dhp)
    w2p = jnp.kron(eye_p, w2).astype(dtype)                             # (Dhp, Dp)
    b1p = jnp.tile(params["b1"].astype(jnp.float32), P).reshape(1, Dhp)
    b2p = jnp.tile(params["b2"].astype(jnp.float32), P).reshape(1, Dp)
    gp = jnp.tile(params["ln_g"].astype(jnp.float32), P).reshape(1, Dp)
    betap = jnp.tile(params["ln_b"].astype(jnp.float32), P).reshape(1, Dp)
    # Block-diagonal per-token averaging matrix (1/D baked in) for segmented LN stats.
    a_avg = jnp.kron(eye_p, jnp.full((D, D), 1.0 / D, jnp.float32))     # (Dp, Dp)

    # Row tile: big (mem-bound kernel; per-grid-step overhead ~0.35us), multiple of 8,
    # and >= 2 grid steps when possible so ("parallel",) spans both v7x TensorCores.
    max_rows = max(8, block_tokens // P)
    if Mp <= 8:
        tm = Mp                                  # single full block (legal: equals array dim)
    else:
        tm = min(max_rows, (((Mp + 1) // 2) + 7) // 8 * 8)
    grid = (pl.cdiv(Mp, tm),)

    row_spec = pl.BlockSpec((tm, Dp), lambda i: (i, 0))

    def const(shape):
        # Grid-invariant operand (weights / biases / LN params / averaging matrix).
        # NOTE: small enough here that double-buffering them is harmless; for large
        # d_in/d_hid on v7x (64 MiB VMEM) consider pipeline_mode=pl.Buffered(1).
        return pl.BlockSpec(shape, lambda i: (0, 0))

    out = pl.pallas_call(
        _ffn_kernel,
        out_shape=jax.ShapeDtypeStruct((Mp, Dp), dtype),
        grid=grid,
        in_specs=[row_spec,
                  const((Dp, Dhp)), const((1, Dhp)),
                  const((Dhp, Dp)), const((1, Dp)),
                  const((1, Dp)), const((1, Dp)),
                  const((Dp, Dp))],
        out_specs=row_spec,
        compiler_params=pltpu.CompilerParams(
            dimension_semantics=("parallel",),
            vmem_limit_bytes=32 * 1024 * 1024),   # within physical VMEM on v5e/v6e/v7x
    )(x2, w1p, b1p, w2p, b2p, gp, betap, a_avg)

    return out.reshape(B, T, D)


def positionwise_ffn_reference(x, params):
    """Pure-JAX reference with identical semantics (for self-check)."""
    w1 = params["w1"][:, :, 0]                                          # (d_hid, d_in)
    w2 = params["w2"][:, :, 0]                                          # (d_in, d_hid)
    h = jnp.maximum(jnp.einsum("btd,hd->bth", x, w1) + params["b1"], 0.0)
    y = jnp.einsum("bth,dh->btd", h, w2) + params["b2"]
    z = x + y
    m = z.mean(-1, keepdims=True)
    v = ((z - m) ** 2).mean(-1, keepdims=True)
    return (z - m) / jnp.sqrt(v + LN_EPS) * params["ln_g"] + params["ln_b"]


if __name__ == "__main__":
    # PositionwiseFeedForwardUseConv(d_in=32, d_hid=64, dropout=0.1), eval-mode forward.
    B, T, D_IN, D_HID = 2, 8, 32, 64

    key = jax.random.PRNGKey(0)
    ks = jax.random.split(key, 7)
    x = jax.random.normal(ks[0], (B, T, D_IN), jnp.float32)

    params = {
        "w1":   0.2 * jax.random.normal(ks[1], (D_HID, D_IN, 1), jnp.float32),
        "b1":   0.1 * jax.random.normal(ks[2], (D_HID,), jnp.float32),
        "w2":   0.2 * jax.random.normal(ks[3], (D_IN, D_HID, 1), jnp.float32),
        "b2":   0.1 * jax.random.normal(ks[4], (D_IN,), jnp.float32),
        "ln_g": 1.0 + 0.1 * jax.random.normal(ks[5], (D_IN,), jnp.float32),
        "ln_b": 0.1 * jax.random.normal(ks[6], (D_IN,), jnp.float32),
    }

    out = jax.block_until_ready(positionwise_ffn_forward(x, params))
    ref = jax.block_until_ready(positionwise_ffn_reference(x, params))

    assert out.shape == x.shape and out.dtype == x.dtype
    err = float(jnp.max(jnp.abs(out - ref)))
    # Tolerance covers MXU default-precision (bf16-operand) matmuls, which both the
    # kernel and the on-device reference use; LN stats themselves are ~f32 accurate.
    if err > 1e-3:
        raise AssertionError(f"kernel/reference mismatch: max abs err = {err}")
    print("KERNEL_OK")
</pallas_src>

<mosaic_0001>
module attributes {stable_mosaic.version = 11 : i64} {
  func.func @_ffn_kernel(%arg0: i32, %arg1: memref<4x128xf32, #tpu.memory_space<vmem>>, %arg2: memref<128x256xf32, #tpu.memory_space<vmem>>, %arg3: memref<1x256xf32, #tpu.memory_space<vmem>>, %arg4: memref<256x128xf32, #tpu.memory_space<vmem>>, %arg5: memref<1x128xf32, #tpu.memory_space<vmem>>, %arg6: memref<1x128xf32, #tpu.memory_space<vmem>>, %arg7: memref<1x128xf32, #tpu.memory_space<vmem>>, %arg8: memref<128x128xf32, #tpu.memory_space<vmem>>, %arg9: memref<4x128xf32, #tpu.memory_space<vmem>>) attributes {dimension_semantics = [#tpu.dimension_semantics<parallel>], iteration_bounds = array<i64: 1>, scalar_prefetch = 0 : i64, scratch_operands = 0 : i64, tpu.core_type = #tpu.core_type<tc>, window_params = [{transform_indices = @transform_0, window_bounds = array<i64: 4, 128>}, {pipeline_mode = #tpu.pipeline_mode<synchronous>, transform_indices = @transform_1, window_bounds = array<i64: 128, 256>}, {pipeline_mode = #tpu.pipeline_mode<synchronous>, transform_indices = @transform_2, window_bounds = array<i64: 1, 256>}, {pipeline_mode = #tpu.pipeline_mode<synchronous>, transform_indices = @transform_3, window_bounds = array<i64: 256, 128>}, {pipeline_mode = #tpu.pipeline_mode<synchronous>, transform_indices = @transform_4, window_bounds = array<i64: 1, 128>}, {pipeline_mode = #tpu.pipeline_mode<synchronous>, transform_indices = @transform_5, window_bounds = array<i64: 1, 128>}, {pipeline_mode = #tpu.pipeline_mode<synchronous>, transform_indices = @transform_6, window_bounds = array<i64: 1, 128>}, {pipeline_mode = #tpu.pipeline_mode<synchronous>, transform_indices = @transform_7, window_bounds = array<i64: 128, 128>}, {transform_indices = @transform_8, window_bounds = array<i64: 4, 128>}]} {
    %c0 = arith.constant 0 : index
    %c0_0 = arith.constant 0 : index
    %0 = vector.load %arg1[%c0, %c0_0] : memref<4x128xf32, #tpu.memory_space<vmem>>, vector<4x128xf32>
    %c0_1 = arith.constant 0 : index
    %c0_2 = arith.constant 0 : index
    %1 = vector.load %arg2[%c0_1, %c0_2] : memref<128x256xf32, #tpu.memory_space<vmem>>, vector<128x256xf32>
    %cst = arith.constant dense<0.000000e+00> : vector<4x256xf32>
    %2 = tpu.matmul %0, %1, %cst {dimension_numbers = #tpu.dot_dimension_numbers<[1], [0], [0], [1], [0, 0, 1, 1], [], []>} : vector<4x128xf32>, vector<128x256xf32>, vector<4x256xf32> -> vector<4x256xf32>
    %c0_3 = arith.constant 0 : index
    %c0_4 = arith.constant 0 : index
    %3 = vector.load %arg3[%c0_3, %c0_4] : memref<1x256xf32, #tpu.memory_space<vmem>>, vector<1x256xf32>
    %4 = vector.broadcast %3 : vector<1x256xf32> to vector<4x256xf32>
    %5 = arith.addf %2, %4 : vector<4x256xf32>
    %cst_5 = arith.constant 0.000000e+00 : f32
    %6 = vector.broadcast %cst_5 : f32 to vector<4x256xf32>
    %7 = arith.maximumf %5, %6 : vector<4x256xf32>
    %c0_6 = arith.constant 0 : index
    %c0_7 = arith.constant 0 : index
    %8 = vector.load %arg4[%c0_6, %c0_7] : memref<256x128xf32, #tpu.memory_space<vmem>>, vector<256x128xf32>
    %cst_8 = arith.constant dense<0.000000e+00> : vector<4x128xf32>
    %9 = tpu.matmul %7, %8, %cst_8 {dimension_numbers = #tpu.dot_dimension_numbers<[1], [0], [0], [1], [0, 0, 1, 1], [], []>} : vector<4x256xf32>, vector<256x128xf32>, vector<4x128xf32> -> vector<4x128xf32>
    %c0_9 = arith.constant 0 : index
    %c0_10 = arith.constant 0 : index
    %10 = vector.load %arg5[%c0_9, %c0_10] : memref<1x128xf32, #tpu.memory_space<vmem>>, vector<1x128xf32>
    %11 = vector.broadcast %10 : vector<1x128xf32> to vector<4x128xf32>
    %12 = arith.addf %9, %11 : vector<4x128xf32>
    %13 = arith.addf %12, %0 : vector<4x128xf32>
    %c0_11 = arith.constant 0 : index
    %c0_12 = arith.constant 0 : index
    %14 = vector.load %arg8[%c0_11, %c0_12] : memref<128x128xf32, #tpu.memory_space<vmem>>, vector<128x128xf32>
    %15 = arith.truncf %13 : vector<4x128xf32> to vector<4x128xbf16>
    %16 = arith.extf %15 : vector<4x128xbf16> to vector<4x128xf32>
    %17 = arith.subf %13, %16 : vector<4x128xf32>
    %cst_13 = arith.constant dense<0.000000e+00> : vector<4x128xf32>
    %18 = tpu.matmul %16, %14, %cst_13 {dimension_numbers = #tpu.dot_dimension_numbers<[1], [0], [0], [1], [0, 0, 1, 1], [], []>} : vector<4x128xf32>, vector<128x128xf32>, vector<4x128xf32> -> vector<4x128xf32>
    %cst_14 = arith.constant dense<0.000000e+00> : vector<4x128xf32>
    %19 = tpu.matmul %17, %14, %cst_14 {dimension_numbers = #tpu.dot_dimension_numbers<[1], [0], [0], [1], [0, 0, 1, 1], [], []>} : vector<4x128xf32>, vector<128x128xf32>, vector<4x128xf32> -> vector<4x128xf32>
    %20 = arith.addf %18, %19 : vector<4x128xf32>
    %21 = arith.mulf %13, %13 : vector<4x128xf32>
    %22 = arith.truncf %21 : vector<4x128xf32> to vector<4x128xbf16>
    %23 = arith.extf %22 : vector<4x128xbf16> to vector<4x128xf32>
    %24 = arith.subf %21, %23 : vector<4x128xf32>
    %cst_15 = arith.constant dense<0.000000e+00> : vector<4x128xf32>
    %25 = tpu.matmul %23, %14, %cst_15 {dimension_numbers = #tpu.dot_dimension_numbers<[1], [0], [0], [1], [0, 0, 1, 1], [], []>} : vector<4x128xf32>, vector<128x128xf32>, vector<4x128xf32> -> vector<4x128xf32>
    %cst_16 = arith.constant dense<0.000000e+00> : vector<4x128xf32>
    %26 = tpu.matmul %24, %14, %cst_16 {dimension_numbers = #tpu.dot_dimension_numbers<[1], [0], [0], [1], [0, 0, 1, 1], [], []>} : vector<4x128xf32>, vector<128x128xf32>, vector<4x128xf32> -> vector<4x128xf32>
    %27 = arith.addf %25, %26 : vector<4x128xf32>
    %28 = arith.mulf %20, %20 : vector<4x128xf32>
    %29 = arith.subf %27, %28 : vector<4x128xf32>
    %30 = arith.subf %13, %20 : vector<4x128xf32>
    %cst_17 = arith.constant 9.99999974E-6 : f32
    %31 = vector.broadcast %cst_17 : f32 to vector<4x128xf32>
    %32 = arith.addf %29, %31 : vector<4x128xf32>
    %33 = math.rsqrt %32 : vector<4x128xf32>
    %34 = arith.mulf %30, %33 : vector<4x128xf32>
    %c0_18 = arith.constant 0 : index
    %c0_19 = arith.constant 0 : index
    %35 = vector.load %arg6[%c0_18, %c0_19] : memref<1x128xf32, #tpu.memory_space<vmem>>, vector<1x128xf32>
    %36 = vector.broadcast %35 : vector<1x128xf32> to vector<4x128xf32>
    %37 = arith.mulf %34, %36 : vector<4x128xf32>
    %c0_20 = arith.constant 0 : index
    %c0_21 = arith.constant 0 : index
    %38 = vector.load %arg7[%c0_20, %c0_21] : memref<1x128xf32, #tpu.memory_space<vmem>>, vector<1x128xf32>
    %39 = vector.broadcast %38 : vector<1x128xf32> to vector<4x128xf32>
    %40 = arith.addf %37, %39 : vector<4x128xf32>
    %c0_22 = arith.constant 0 : index
    %c0_23 = arith.constant 0 : index
    %41 = vector.load %arg9[%c0_22, %c0_23] : memref<4x128xf32, #tpu.memory_space<vmem>>, vector<4x128xf32>
    tpu.vector_store %arg9[%c0_22, %c0_23], %40 {strides = array<i32>} : memref<4x128xf32, #tpu.memory_space<vmem>>, vector<4x128xf32>,
    return
  }
  func.func @transform_0(%arg0: i32) -> (i32, i32) {
    %c0_i32 = arith.constant 0 : i32
    %c0_i32_0 = arith.constant 0 : i32
    return %arg0, %c0_i32 : i32, i32
  }
  func.func @transform_1(%arg0: i32) -> (i32, i32) {
    %c0_i32 = arith.constant 0 : i32
    %c0_i32_0 = arith.constant 0 : i32
    %c0_i32_1 = arith.constant 0 : i32
    return %c0_i32, %c0_i32_0 : i32, i32
  }
  func.func @transform_2(%arg0: i32) -> (i32, i32) {
    %c0_i32 = arith.constant 0 : i32
    %c0_i32_0 = arith.constant 0 : i32
    %c0_i32_1 = arith.constant 0 : i32
    return %c0_i32, %c0_i32_0 : i32, i32
  }
  func.func @transform_3(%arg0: i32) -> (i32, i32) {
    %c0_i32 = arith.constant 0 : i32
    %c0_i32_0 = arith.constant 0 : i32
    %c0_i32_1 = arith.constant 0 : i32
    return %c0_i32, %c0_i32_0 : i32, i32
  }
  func.func @transform_4(%arg0: i32) -> (i32, i32) {
    %c0_i32 = arith.constant 0 : i32
    %c0_i32_0 = arith.constant 0 : i32
    %c0_i32_1 = arith.constant 0 : i32
    return %c0_i32, %c0_i32_0 : i32, i32
  }
  func.func @transform_5(%arg0: i32) -> (i32, i32) {
    %c0_i32 = arith.constant 0 : i32
    %c0_i32_0 = arith.constant 0 : i32
    %c0_i32_1 = arith.constant 0 : i32
    return %c0_i32, %c0_i32_0 : i32, i32
  }
  func.func @transform_6(%arg0: i32) -> (i32, i32) {
    %c0_i32 = arith.constant 0 : i32
    %c0_i32_0 = arith.constant 0 : i32
    %c0_i32_1 = arith.constant 0 : i32
    return %c0_i32, %c0_i32_0 : i32, i32
  }
  func.func @transform_7(%arg0: i32) -> (i32, i32) {
    %c0_i32 = arith.constant 0 : i32
    %c0_i32_0 = arith.constant 0 : i32
    %c0_i32_1 = arith.constant 0 : i32
    return %c0_i32, %c0_i32_0 : i32, i32
  }
  func.func @transform_8(%arg0: i32) -> (i32, i32) {
    %c0_i32 = arith.constant 0 : i32
    %c0_i32_0 = arith.constant 0 : i32
    return %arg0, %c0_i32 : i32, i32
  }
}

</mosaic_0001>

<llo_original>
// kernel: tpu_custom_call.1
$region0: #{tpu_custom_call.1}
  #allocation0 [shape = 'u32[]', space=smem, size = 0x4, offset = 0x4, fixed_abs, tag = 'smem constant byte address 0x4 - core index']
  #allocation1 [shape = 'u32[72,128]{1,0:T(1,128)}', space=vmem, size = 0x9000, scoped, tag = 'internal scratch']
  %s0 = inlined_call_operand.hbm [shape: f32[4,128], index: 0, kind: input, shape index: {}]
  %s1 = inlined_call_operand.hbm [shape: f32[128,256], index: 1, kind: input, shape index: {}]
  %s2 = inlined_call_operand.hbm [shape: f32[1,256], index: 2, kind: input, shape index: {}]
  %s3 = inlined_call_operand.hbm [shape: f32[256,128], index: 3, kind: input, shape index: {}]
  %s4 = inlined_call_operand.vmem [shape: f32[1,128], index: 4, kind: input, shape index: {}]
  %s5 = inlined_call_operand.vmem [shape: f32[1,128], index: 5, kind: input, shape index: {}]
  %s6 = inlined_call_operand.vmem [shape: f32[1,128], index: 6, kind: input, shape index: {}]
  %s7 = inlined_call_operand.hbm [shape: f32[128,128], index: 7, kind: input, shape index: {}]
  %s8 = inlined_call_operand.hbm [shape: f32[4,128], index: 8, kind: output, shape index: {}]
  %s9 = sld [smem:[#allocation0]]
  $region62: #{tpu_custom_call.1} parent=0
    _
  %s11 = ssub.s32 1, %s9
  %s12 = scalar_select 0, %s11, %s9
  $region1: #{tpu_custom_call.1} parent=0
    #allocation2 [shape = 'u8[2048]{0}', space=vmem, size = 0x800, scoped, tag = 'input window, operand 0, single buffered']
    #allocation3 [shape = 's32[1]{0}', space=sflag, size = 0x4, scoped, tag = 'scoped memory for tpu_custom_call.1']
    #allocation4 [shape = 's32[1]{0}', space=sflag, size = 0x4, scoped, tag = 'scoped memory for tpu_custom_call.1']
    #allocation5 [shape = 'u8[131072]{0}', space=vmem, size = 0x20000, scoped, tag = 'input window, operand 1, single buffered']
    #allocation6 [shape = 's32[1]{0}', space=sflag, size = 0x4, scoped, tag = 'scoped memory for tpu_custom_call.1']
    #allocation7 [shape = 'u8[1024]{0}', space=vmem, size = 0x400, scoped, tag = 'input window, operand 2, single buffered']
    #allocation8 [shape = 'u8[131072]{0}', space=vmem, size = 0x20000, scoped, tag = 'input window, operand 3, single buffered']
    #allocation9 [shape = 's32[1]{0}', space=sflag, size = 0x4, scoped, tag = 'scoped memory for tpu_custom_call.1']
    #allocation10 [shape = 'u8[65536]{0}', space=vmem, size = 0x10000, scoped, tag = 'input window, operand 7, single buffered']
    #allocation11 [shape = 'u8[2048]{0}', space=vmem, size = 0x800, scoped, tag = 'output window, operand 0, single buffered']
    %13 = vsyncpa [#allocation3], 0
    %14 = vsyncpa [#allocation6], 0
    %15 = vsyncpa [#allocation9], 0
    %16 = vsyncpa [#allocation4], 0
    // Predicated region
    $region2: #{tpu_custom_call.1} parent=1 // pred_check
      _
    $region3: #{tpu_custom_call.1} parent=1 // pred_check_branch
      %18 = sbr.rel (0) target = $region5
    $region4: #{tpu_custom_call.1} parent=1 // pred_region
      %20 = vsyncadd [#allocation3], 0
      %s22 = sshll.u32 %s0, 4
      %s23 = int_to_ptr.hbm [resolvable:$true] %s22
      %s24 = sshll.u32 [#allocation2], 4
      %s25 = int_to_ptr.vmem [resolvable:$true] %s24
      %27 = dma.hbm_to_vmem [thread:$0]  %s23, 64, %s25, [#allocation3]
    $region5: #{tpu_custom_call.1} parent=1 // pred_fallthru
      _
    // Predicated region
    $region6: #{tpu_custom_call.1} parent=1 // pred_check
      _
    $region7: #{tpu_custom_call.1} parent=1 // pred_check_branch
      %29 = sbr.rel (0) target = $region9
    $region8: #{tpu_custom_call.1} parent=1 // pred_region
      %31 = vsyncadd [#allocation6], 0
      %s32 = sshll.u32 %s1, 4
      %s33 = int_to_ptr.hbm [resolvable:$true] %s32
      %s34 = sshll.u32 [#allocation5], 4
      %s35 = int_to_ptr.vmem [resolvable:$true] %s34
      %40 = dma.hbm_to_vmem [thread:$0]  %s33, 4096, %s35, [#allocation6], 256, 256, 16
    $region9: #{tpu_custom_call.1} parent=1 // pred_fallthru
      _
    // Predicated region
    $region10: #{tpu_custom_call.1} parent=1 // pred_check
      _
    $region11: #{tpu_custom_call.1} parent=1 // pred_check_branch
      %42 = sbr.rel (0) target = $region13
    $region12: #{tpu_custom_call.1} parent=1 // pred_region
      %44 = vsyncadd [#allocation6], 0
      %s46 = sshll.u32 %s2, 4
      %s47 = int_to_ptr.hbm [resolvable:$true] %s46
      %s48 = sshll.u32 [#allocation7], 4
      %s49 = int_to_ptr.vmem [resolvable:$true] %s48
      %51 = dma.hbm_to_vmem [thread:$0]  %s47, 32, %s49, [#allocation6]
    $region13: #{tpu_custom_call.1} parent=1 // pred_fallthru
      _
    // Predicated region
    $region14: #{tpu_custom_call.1} parent=1 // pred_check
      _
    $region15: #{tpu_custom_call.1} parent=1 // pred_check_branch
      %53 = sbr.rel (0) target = $region17
    $region16: #{tpu_custom_call.1} parent=1 // pred_region
      %55 = vsyncadd [#allocation9], 0
      %s56 = sshll.u32 %s3, 4
      %s57 = int_to_ptr.hbm [resolvable:$true] %s56
      %s58 = sshll.u32 [#allocation8], 4
      %s59 = int_to_ptr.vmem [resolvable:$true] %s58
      %64 = dma.hbm_to_vmem [thread:$0]  %s57, 4096, %s59, [#allocation9], 128, 128, 8
    $region17: #{tpu_custom_call.1} parent=1 // pred_fallthru
      _
    // Predicated region
    $region18: #{tpu_custom_call.1} parent=1 // pred_check
      _
    $region19: #{tpu_custom_call.1} parent=1 // pred_check_branch
      %66 = sbr.rel (0) target = $region21
    $region20: #{tpu_custom_call.1} parent=1 // pred_region
      _
    $region21: #{tpu_custom_call.1} parent=1 // pred_fallthru
      _
    // Predicated region
    $region22: #{tpu_custom_call.1} parent=1 // pred_check
      _
    $region23: #{tpu_custom_call.1} parent=1 // pred_check_branch
      %68 = sbr.rel (0) target = $region25
    $region24: #{tpu_custom_call.1} parent=1 // pred_region
      _
    $region25: #{tpu_custom_call.1} parent=1 // pred_fallthru
      _
    // Predicated region
    $region26: #{tpu_custom_call.1} parent=1 // pred_check
      _
    $region27: #{tpu_custom_call.1} parent=1 // pred_check_branch
      %70 = sbr.rel (0) target = $region29
    $region28: #{tpu_custom_call.1} parent=1 // pred_region
      _
    $region29: #{tpu_custom_call.1} parent=1 // pred_fallthru
      _
    // Predicated region
    $region30: #{tpu_custom_call.1} parent=1 // pred_check
      _
    $region31: #{tpu_custom_call.1} parent=1 // pred_check_branch
      %72 = sbr.rel (0) target = $region33
    $region32: #{tpu_custom_call.1} parent=1 // pred_region
      %74 = vsyncadd [#allocation9], 0
      %s75 = sshll.u32 %s7, 4
      %s76 = int_to_ptr.hbm [resolvable:$true] %s75
      %s77 = sshll.u32 [#allocation10], 4
      %s78 = int_to_ptr.vmem [resolvable:$true] %s77
      %83 = dma.hbm_to_vmem [thread:$0]  %s76, 2048, %s78, [#allocation9], 128, 128, 8
    $region33: #{tpu_custom_call.1} parent=1 // pred_fallthru
      _
    // Predicated region
    $region34: #{tpu_custom_call.1} parent=1 // pred_check
      _
    $region35: #{tpu_custom_call.1} parent=1 // pred_check_branch
      %85 = sbr.rel (0) target = $region37
    $region36: #{tpu_custom_call.1} parent=1 // pred_region
      %87 = dma.done [#allocation3], 64
    $region37: #{tpu_custom_call.1} parent=1 // pred_fallthru
      _
    // Predicated region
    $region38: #{tpu_custom_call.1} parent=1 // pred_check
      _
    $region39: #{tpu_custom_call.1} parent=1 // pred_check_branch
      %89 = sbr.rel (0) target = $region41
    $region40: #{tpu_custom_call.1} parent=1 // pred_region
      %91 = dma.done [#allocation6], 4096
    $region41: #{tpu_custom_call.1} parent=1 // pred_fallthru
      _
    // Predicated region
    $region42: #{tpu_custom_call.1} parent=1 // pred_check
      _
    $region43: #{tpu_custom_call.1} parent=1 // pred_check_branch
      %93 = sbr.rel (0) target = $region45
    $region44: #{tpu_custom_call.1} parent=1 // pred_region
      %95 = dma.done [#allocation6], 32
    $region45: #{tpu_custom_call.1} parent=1 // pred_fallthru
      _
    // Predicated region
    $region46: #{tpu_custom_call.1} parent=1 // pred_check
      _
    $region47: #{tpu_custom_call.1} parent=1 // pred_check_branch
      %97 = sbr.rel (0) target = $region49
    $region48: #{tpu_custom_call.1} parent=1 // pred_region
      %99 = dma.done [#allocation9], 4096
    $region49: #{tpu_custom_call.1} parent=1 // pred_fallthru
      _
    // Predicated region
    $region50: #{tpu_custom_call.1} parent=1 // pred_check
      _
    $region51: #{tpu_custom_call.1} parent=1 // pred_check_branch
      %101 = sbr.rel (0) target = $region53
    $region52: #{tpu_custom_call.1} parent=1 // pred_region
      %103 = dma.done [#allocation9], 2048
    $region53: #{tpu_custom_call.1} parent=1 // pred_fallthru
      _
    %v104 = vld [vmem:[#allocation2] sm:$0xf]
    %v105 = vld [vmem:[#allocation5] sm:$0xff]
    %v106 = vld [vmem:[#allocation5 + $0x8] sm:$0xff]
    %v107 = vld [vmem:[#allocation5 + $0x10] sm:$0xff]
    %v108 = vld [vmem:[#allocation5 + $0x18] sm:$0xff]
    %v109 = vld [vmem:[#allocation5 + $0x20] sm:$0xff]
    %v110 = vld [vmem:[#allocation5 + $0x28] sm:$0xff]
    %v111 = vld [vmem:[#allocation5 + $0x30] sm:$0xff]
    %v112 = vld [vmem:[#allocation5 + $0x38] sm:$0xff]
    %v113 = vld [vmem:[#allocation5 + $0x40] sm:$0xff]
    %v114 = vld [vmem:[#allocation5 + $0x48] sm:$0xff]
    %v115 = vld [vmem:[#allocation5 + $0x50] sm:$0xff]
    %v116 = vld [vmem:[#allocation5 + $0x58] sm:$0xff]
    %v117 = vld [vmem:[#allocation5 + $0x60] sm:$0xff]
    %v118 = vld [vmem:[#allocation5 + $0x68] sm:$0xff]
    %v119 = vld [vmem:[#allocation5 + $0x70] sm:$0xff]
    %v120 = vld [vmem:[#allocation5 + $0x78] sm:$0xff]
    %v121 = vld [vmem:[#allocation5 + $0x80] sm:$0xff]
    %v122 = vld [vmem:[#allocation5 + $0x88] sm:$0xff]
    %v123 = vld [vmem:[#allocation5 + $0x90] sm:$0xff]
    %v124 = vld [vmem:[#allocation5 + $0x98] sm:$0xff]
    %v125 = vld [vmem:[#allocation5 + $0xa0] sm:$0xff]
    %v126 = vld [vmem:[#allocation5 + $0xa8] sm:$0xff]
    %v127 = vld [vmem:[#allocation5 + $0xb0] sm:$0xff]
    %v128 = vld [vmem:[#allocation5 + $0xb8] sm:$0xff]
    %v129 = vld [vmem:[#allocation5 + $0xc0] sm:$0xff]
    %v130 = vld [vmem:[#allocation5 + $0xc8] sm:$0xff]
    %v131 = vld [vmem:[#allocation5 + $0xd0] sm:$0xff]
    %v132 = vld [vmem:[#allocation5 + $0xd8] sm:$0xff]
    %v133 = vld [vmem:[#allocation5 + $0xe0] sm:$0xff]
    %v134 = vld [vmem:[#allocation5 + $0xe8] sm:$0xff]
    %v135 = vld [vmem:[#allocation5 + $0xf0] sm:$0xff]
    %v136 = vld [vmem:[#allocation5 + $0xf8] sm:$0xff]
    %v137 = vld [vmem:[#allocation7] sm:$0x3]
    %v139 = vperm.slane %v137, 0
    %v140 = vperm.slane %v137, 1
    %143 = vmatpush.msra.mxu0 %v135
    %144 = vmatpush.msra.mxu0 %v133
    %145 = vmatpush.msra.mxu0 %v131
    %146 = vmatpush.msra.mxu0 %v129
    %147 = vmatpush.msra.mxu0 %v127
    %148 = vmatpush.msra.mxu0 %v125
    %149 = vmatpush.msra.mxu0 %v123
    %150 = vmatpush.msra.mxu0 %v121
    %151 = vmatpush.msra.mxu0 %v119
    %152 = vmatpush.msra.mxu0 %v117
    %153 = vmatpush.msra.mxu0 %v115
    %154 = vmatpush.msra.mxu0 %v113
    %155 = vmatpush.msra.mxu0 %v111
    %156 = vmatpush.msra.mxu0 %v109
    %157 = vmatpush.msra.mxu0 %v107
    %158 = vmatpush.msra.mxu0 %v105
    %159 = vmatmul.f32.gmra.mxu0 %v104
    %v160 = vpop.f32.mrf.mxu0
    %v161 = vadd.f32 %v139, %v160
    %162 = vdwg.mxu0
    %163 = vmatpush.msra.mxu0 %v136
    %164 = vmatpush.msra.mxu0 %v134
    %165 = vmatpush.msra.mxu0 %v132
    %166 = vmatpush.msra.mxu0 %v130
    %167 = vmatpush.msra.mxu0 %v128
    %168 = vmatpush.msra.mxu0 %v126
    %169 = vmatpush.msra.mxu0 %v124
    %170 = vmatpush.msra.mxu0 %v122
    %171 = vmatpush.msra.mxu0 %v120
    %172 = vmatpush.msra.mxu0 %v118
    %173 = vmatpush.msra.mxu0 %v116
    %174 = vmatpush.msra.mxu0 %v114
    %175 = vmatpush.msra.mxu0 %v112
    %176 = vmatpush.msra.mxu0 %v110
    %177 = vmatpush.msra.mxu0 %v108
    %178 = vmatpush.msra.mxu0 %v106
    %179 = vmatmul.f32.gmra.mxu0 %v104
    %v180 = vpop.f32.mrf.mxu0
    %v181 = vadd.f32 %v140, %v180
    %182 = vdwg.mxu0
    %v183 = vmax.f32 %v161, 0.0
    %v184 = vmax.f32 %v181, 0.0
    %v185 = vld [vmem:[#allocation8] sm:$0xff]
    %v186 = vld [vmem:[#allocation8 + $0x8] sm:$0xff]
    %v187 = vld [vmem:[#allocation8 + $0x10] sm:$0xff]
    %v188 = vld [vmem:[#allocation8 + $0x18] sm:$0xff]
    %v189 = vld [vmem:[#allocation8 + $0x20] sm:$0xff]
    %v190 = vld [vmem:[#allocation8 + $0x28] sm:$0xff]
    %v191 = vld [vmem:[#allocation8 + $0x30] sm:$0xff]
    %v192 = vld [vmem:[#allocation8 + $0x38] sm:$0xff]
    %v193 = vld [vmem:[#allocation8 + $0x40] sm:$0xff]
    %v194 = vld [vmem:[#allocation8 + $0x48] sm:$0xff]
    %v195 = vld [vmem:[#allocation8 + $0x50] sm:$0xff]
    %v196 = vld [vmem:[#allocation8 + $0x58] sm:$0xff]
    %v197 = vld [vmem:[#allocation8 + $0x60] sm:$0xff]
    %v198 = vld [vmem:[#allocation8 + $0x68] sm:$0xff]
    %v199 = vld [vmem:[#allocation8 + $0x70] sm:$0xff]
    %v200 = vld [vmem:[#allocation8 + $0x78] sm:$0xff]
    %v201 = vld [vmem:[#allocation8 + $0x80] sm:$0xff]
    %v202 = vld [vmem:[#allocation8 + $0x88] sm:$0xff]
    %v203 = vld [vmem:[#allocation8 + $0x90] sm:$0xff]
    %v204 = vld [vmem:[#allocation8 + $0x98] sm:$0xff]
    %v205 = vld [vmem:[#allocation8 + $0xa0] sm:$0xff]
    %v206 = vld [vmem:[#allocation8 + $0xa8] sm:$0xff]
    %v207 = vld [vmem:[#allocation8 + $0xb0] sm:$0xff]
    %v208 = vld [vmem:[#allocation8 + $0xb8] sm:$0xff]
    %v209 = vld [vmem:[#allocation8 + $0xc0] sm:$0xff]
    %v210 = vld [vmem:[#allocation8 + $0xc8] sm:$0xff]
    %v211 = vld [vmem:[#allocation8 + $0xd0] sm:$0xff]
    %v212 = vld [vmem:[#allocation8 + $0xd8] sm:$0xff]
    %v213 = vld [vmem:[#allocation8 + $0xe0] sm:$0xff]
    %v214 = vld [vmem:[#allocation8 + $0xe8] sm:$0xff]
    %v215 = vld [vmem:[#allocation8 + $0xf0] sm:$0xff]
    %v216 = vld [vmem:[#allocation8 + $0xf8] sm:$0xff]
    %v217 = vld [vmem:[%s4] sm:$0x1]
    %v219 = vperm.slane %v217, 0
    %221 = vmatpush.msra.mxu0 %v200
    %222 = vmatpush.msra.mxu0 %v199
    %223 = vmatpush.msra.mxu0 %v198
    %224 = vmatpush.msra.mxu0 %v197
    %225 = vmatpush.msra.mxu0 %v196
    %226 = vmatpush.msra.mxu0 %v195
    %227 = vmatpush.msra.mxu0 %v194
    %228 = vmatpush.msra.mxu0 %v193
    %229 = vmatpush.msra.mxu0 %v192
    %230 = vmatpush.msra.mxu0 %v191
    %231 = vmatpush.msra.mxu0 %v190
    %232 = vmatpush.msra.mxu0 %v189
    %233 = vmatpush.msra.mxu0 %v188
    %234 = vmatpush.msra.mxu0 %v187
    %235 = vmatpush.msra.mxu0 %v186
    %236 = vmatpush.msra.mxu0 %v185
    %237 = vmatmul.f32.gmra.mxu0 %v183
    %v238 = vpop.f32.mrf.mxu0
    %v239 = vadd.f32 %v219, %v238
    %240 = vdwg.mxu0
    %241 = vmatpush.msra.mxu0 %v216
    %242 = vmatpush.msra.mxu0 %v215
    %243 = vmatpush.msra.mxu0 %v214
    %244 = vmatpush.msra.mxu0 %v213
    %245 = vmatpush.msra.mxu0 %v212
    %246 = vmatpush.msra.mxu0 %v211
    %247 = vmatpush.msra.mxu0 %v210
    %248 = vmatpush.msra.mxu0 %v209
    %249 = vmatpush.msra.mxu0 %v208
    %250 = vmatpush.msra.mxu0 %v207
    %251 = vmatpush.msra.mxu0 %v206
    %252 = vmatpush.msra.mxu0 %v205
    %253 = vmatpush.msra.mxu0 %v204
    %254 = vmatpush.msra.mxu0 %v203
    %255 = vmatpush.msra.mxu0 %v202
    %256 = vmatpush.msra.mxu0 %v201
    %257 = vmatmul.f32.gmra.mxu0 %v184
    %v258 = vpop.f32.mrf.mxu0
    %v259 = vadd.f32 %v239, %v258
    %260 = vdwg.mxu0
    %v261 = vadd.f32 %v259, %v104
    %v262 = vld [vmem:[#allocation10] sm:$0xff]
    %v263 = vld [vmem:[#allocation10 + $0x8] sm:$0xff]
    %v264 = vld [vmem:[#allocation10 + $0x10] sm:$0xff]
    %v265 = vld [vmem:[#allocation10 + $0x18] sm:$0xff]
    %v266 = vld [vmem:[#allocation10 + $0x20] sm:$0xff]
    %v267 = vld [vmem:[#allocation10 + $0x28] sm:$0xff]
    %v268 = vld [vmem:[#allocation10 + $0x30] sm:$0xff]
    %v269 = vld [vmem:[#allocation10 + $0x38] sm:$0xff]
    %v270 = vld [vmem:[#allocation10 + $0x40] sm:$0xff]
    %v271 = vld [vmem:[#allocation10 + $0x48] sm:$0xff]
    %v272 = vld [vmem:[#allocation10 + $0x50] sm:$0xff]
    %v273 = vld [vmem:[#allocation10 + $0x58] sm:$0xff]
    %v274 = vld [vmem:[#allocation10 + $0x60] sm:$0xff]
    %v275 = vld [vmem:[#allocation10 + $0x68] sm:$0xff]
    %v276 = vld [vmem:[#allocation10 + $0x70] sm:$0xff]
    %v277 = vld [vmem:[#allocation10 + $0x78] sm:$0xff]
    %v278 = vpack.c.bf16 %v261, %v261
    %v279 = vunpack.c.l.bf16 %v278
    %v280 = vsub.f32 %v261, %v279
    %281 = vmatpush.msra.mxu0 %v277
    %282 = vmatpush.msra.mxu0 %v276
    %283 = vmatpush.msra.mxu0 %v275
    %284 = vmatpush.msra.mxu0 %v274
    %285 = vmatpush.msra.mxu0 %v273
    %286 = vmatpush.msra.mxu0 %v272
    %287 = vmatpush.msra.mxu0 %v271
    %288 = vmatpush.msra.mxu0 %v270
    %289 = vmatpush.msra.mxu0 %v269
    %290 = vmatpush.msra.mxu0 %v268
    %291 = vmatpush.msra.mxu0 %v267
    %292 = vmatpush.msra.mxu0 %v266
    %293 = vmatpush.msra.mxu0 %v265
    %294 = vmatpush.msra.mxu0 %v264
    %295 = vmatpush.msra.mxu0 %v263
    %296 = vmatpush.msra.mxu0 %v262
    %297 = vmatmul.f32.gmra.mxu0 %v280
    %v298 = vpop.f32.mrf.mxu0
    %v299 = vadd.f32 0.0, %v298
    %300 = vdwg.mxu0
    %301 = vmatpush.msra.mxu0 %v277
    %302 = vmatpush.msra.mxu0 %v276
    %303 = vmatpush.msra.mxu0 %v275
    %304 = vmatpush.msra.mxu0 %v274
    %305 = vmatpush.msra.mxu0 %v273
    %306 = vmatpush.msra.mxu0 %v272
    %307 = vmatpush.msra.mxu0 %v271
    %308 = vmatpush.msra.mxu0 %v270
    %309 = vmatpush.msra.mxu0 %v269
    %310 = vmatpush.msra.mxu0 %v268
    %311 = vmatpush.msra.mxu0 %v267
    %312 = vmatpush.msra.mxu0 %v266
    %313 = vmatpush.msra.mxu0 %v265
    %314 = vmatpush.msra.mxu0 %v264
    %315 = vmatpush.msra.mxu0 %v263
    %316 = vmatpush.msra.mxu0 %v262
    %317 = vmatmul.f32.gmra.mxu0 %v279
    %v318 = vpop.f32.mrf.mxu0
    %v319 = vadd.f32 %v299, %v318
    %320 = vdwg.mxu0
    %v321 = vmul.f32 %v261, %v261
    %v322 = vpack.c.bf16 %v321, %v321
    %v323 = vunpack.c.l.bf16 %v322
    %v324 = vsub.f32 %v321, %v323
    %325 = vmatpush.msra.mxu0 %v277
    %326 = vmatpush.msra.mxu0 %v276
    %327 = vmatpush.msra.mxu0 %v275
    %328 = vmatpush.msra.mxu0 %v274
    %329 = vmatpush.msra.mxu0 %v273
    %330 = vmatpush.msra.mxu0 %v272
    %331 = vmatpush.msra.mxu0 %v271
    %332 = vmatpush.msra.mxu0 %v270
    %333 = vmatpush.msra.mxu0 %v269
    %334 = vmatpush.msra.mxu0 %v268
    %335 = vmatpush.msra.mxu0 %v267
    %336 = vmatpush.msra.mxu0 %v266
    %337 = vmatpush.msra.mxu0 %v265
    %338 = vmatpush.msra.mxu0 %v264
    %339 = vmatpush.msra.mxu0 %v263
    %340 = vmatpush.msra.mxu0 %v262
    %341 = vmatmul.f32.gmra.mxu0 %v324
    %v342 = vpop.f32.mrf.mxu0
    %v343 = vadd.f32 0.0, %v342
    %344 = vdwg.mxu0
    %345 = vmatpush.msra.mxu0 %v277
    %346 = vmatpush.msra.mxu0 %v276
    %347 = vmatpush.msra.mxu0 %v275
    %348 = vmatpush.msra.mxu0 %v274
    %349 = vmatpush.msra.mxu0 %v273
    %350 = vmatpush.msra.mxu0 %v272
    %351 = vmatpush.msra.mxu0 %v271
    %352 = vmatpush.msra.mxu0 %v270
    %353 = vmatpush.msra.mxu0 %v269
    %354 = vmatpush.msra.mxu0 %v268
    %355 = vmatpush.msra.mxu0 %v267
    %356 = vmatpush.msra.mxu0 %v266
    %357 = vmatpush.msra.mxu0 %v265
    %358 = vmatpush.msra.mxu0 %v264
    %359 = vmatpush.msra.mxu0 %v263
    %360 = vmatpush.msra.mxu0 %v262
    %361 = vmatmul.f32.gmra.mxu0 %v323
    %v362 = vpop.f32.mrf.mxu0
    %v363 = vadd.f32 %v343, %v362
    %364 = vdwg.mxu0
    %v365 = vmul.f32 %v319, %v319
    %v366 = vsub.f32 %v363, %v365
    %v367 = vsub.f32 %v261, %v319
    %v368 = vadd.f32 %v366, 1e-05
    %v369 = vrsqrt.pop %v368
    %v370 = vmul.f32 %v369, %v368
    %v371 = vmul.f32 %v370, %v369
    %v372 = vmul.f32 0.5, %v371
    %v373 = vsub.f32 1.5, %v372
    %v374 = vmul.f32 %v369, %v373
    %vm375 = vweird.f32 %v368
    %vm376 = vweird.f32 %v369
    %vm377 = vmor %vm375, %vm376
    %v378 = vsel %vm377, %v369, %v374
    %v379 = vmul.f32 %v367, %v378
    %v380 = vld [vmem:[%s5] sm:$0x1]
    %v382 = vperm.slane %v380, 0
    %v384 = vmul.f32 %v379, %v382
    %v385 = vld [vmem:[%s6] sm:$0x1]
    %v387 = vperm.slane %v385, 0
    %v389 = vadd.f32 %v384, %v387
    %390 = vst [vmem:[#allocation11] sm:$0xf] %v389
    // Predicated region
    $region54: #{tpu_custom_call.1} parent=1 // pred_check
      _
    $region55: #{tpu_custom_call.1} parent=1 // pred_check_branch
      %392 = sbr.rel (0) target = $region57
    $region56: #{tpu_custom_call.1} parent=1 // pred_region
      %394 = vsyncadd [#allocation4], 0
      %s396 = sshll.u32 [#allocation11], 4
      %s397 = int_to_ptr.vmem [resolvable:$true] %s396
      %s398 = sshll.u32 %s8, 4
      %s399 = int_to_ptr.hbm [resolvable:$true] %s398
      %401 = dma.vmem_to_hbm [thread:$0]  %s397, 64, %s399, [#allocation4]
    $region57: #{tpu_custom_call.1} parent=1 // pred_fallthru
      _
    // Predicated region
    $region58: #{tpu_custom_call.1} parent=1 // pred_check
      _
    $region59: #{tpu_custom_call.1} parent=1 // pred_check_branch
      %403 = sbr.rel (0) target = $region61
    $region60: #{tpu_custom_call.1} parent=1 // pred_region
      %405 = dma.done [#allocation4], 64
    $region61: #{tpu_custom_call.1} parent=1 // pred_fallthru
      _
    %406 = vsyncpa [#allocation3], 1
    %407 = vsyncpa [#allocation6], 1
    %408 = vsyncpa [#allocation9], 1
    %409 = vsyncpa [#allocation4], 1

</llo_original>
